<compile_context>
chip_gen: v5e
topology: v5e:2x2
jax: 0.10.0
libtpu: 0.0.40
codegen_flags: <defaults>
</compile_context>

<pallas_src>
import functools

import jax
import jax.numpy as jnp
from jax import lax
from jax.experimental import pallas as pl
from jax.experimental.pallas import tpu as pltpu


def _round_up(x, m):
    return (x + m - 1) // m * m


# ----------------- kernel 1: tiled conv matmul + BN statistics ---------------
def _conv_stats_kernel(p_ref, w_ref, o_ref, stats_ref, acc_ref, *,
                       collect_stats, act_mode, act_slope):
    i = pl.program_id(0)
    k = pl.program_id(1)
    nk = pl.num_programs(1)

    @pl.when((i == 0) & (k == 0))
    def _init_stats():
        stats_ref[...] = jnp.zeros_like(stats_ref)

    @pl.when(k == 0)
    def _init_acc():
        acc_ref[...] = jnp.zeros_like(acc_ref)

    # bf16 operands, f32 accumulation on the MXU.
    acc_ref[...] += jnp.dot(p_ref[...], w_ref[...],
                            preferred_element_type=jnp.float32)

    @pl.when(k == nk - 1)
    def _finalize():
        y = acc_ref[...]                                     # (tm, Cp) f32
        if collect_stats:
            # Exact BatchNorm reduction across all M tiles (padded rows are 0).
            stats_ref[0:1, :] += jnp.sum(y, axis=0, keepdims=True)
            stats_ref[1:2, :] += jnp.sum(y * y, axis=0, keepdims=True)
        # Activation here only when there is no BatchNorm pass afterwards.
        if act_mode == "leaky":
            y = jnp.where(y >= 0, y, y * act_slope)
        elif act_mode == "relu":
            y = jnp.maximum(y, 0.0)
        o_ref[...] = y.astype(o_ref.dtype)


# ----------------- kernel 2: folded BN scale/shift + activation --------------
def _bn_act_kernel(y_ref, scale_ref, shift_ref, o_ref, *, act_mode, act_slope):
    y = y_ref[...] * scale_ref[...] + shift_ref[...]
    if act_mode == "leaky":
        y = jnp.where(y >= 0, y, y * act_slope)
    elif act_mode == "relu":
        y = jnp.maximum(y, 0.0)
    o_ref[...] = y.astype(o_ref.dtype)


def cbr2d_forward(x, weight, gamma=None, beta=None, *, kernel_size=4, stride=4,
                  padding=1, norm=True, relu=[], eps=1e-5,
                  compute_dtype=jnp.bfloat16):
    """x: NCHW float32, weight: (Cout, Cin, KH, KW). Returns NCHW."""
    N, Cin, H, W = x.shape
    Cout = weight.shape[0]
    KH = KW = kernel_size
    OH = (H + 2 * padding - KH) // stride + 1
    OW = (W + 2 * padding - KW) // stride + 1
    M = N * OH * OW
    K = Cin * KH * KW

    # Activation semantics match the PyTorch ReLU helper ([], >0, ==0).
    if relu == []:
        act_mode, act_slope = "none", 0.0
    elif relu > 0:
        act_mode, act_slope = "leaky", float(relu)
    elif relu == 0:
        act_mode, act_slope = "relu", 0.0
    else:
        act_mode, act_slope = "none", 0.0   # same behavior as before

    # --- im2col glue (plain JAX). With the module default stride==kernel_size
    # there is no data duplication.
    # TODO(synk): for overlapping windows (stride < kernel), gather the KHxKW
    # window inside the kernel with manual DMA from HBM instead of
    # materializing the patches matrix.
    xp = jnp.pad(x, ((0, 0), (0, 0), (padding, padding), (padding, padding)))
    cols = []
    for kh in range(KH):
        for kw in range(KW):
            cols.append(xp[:, :,
                           kh:kh + (OH - 1) * stride + 1:stride,
                           kw:kw + (OW - 1) * stride + 1:stride])
    patches = jnp.stack(cols, axis=0).reshape(KH, KW, N, Cin, OH, OW)
    patches = patches.transpose(2, 4, 5, 3, 0, 1).reshape(M, K)   # (M, K)
    w2 = weight.reshape(Cout, K).T                                 # (K, Cout)

    # --- pad to lane/tile friendly shapes ------------------------------------
    Cp = _round_up(Cout, 128)                 # lane-dense output / MXU N dim
    K128 = _round_up(K, 128)
    tk = K128 if K128 <= 512 else 512
    Kp = _round_up(K128, tk)
    tm = min(512, _round_up(M, 8))
    Mp = _round_up(M, tm)
    num_m, num_k = Mp // tm, Kp // tk

    patches_p = jnp.pad(patches.astype(compute_dtype),
                        ((0, Mp - M), (0, Kp - K)))
    w_p = jnp.pad(w2.astype(compute_dtype), ((0, Kp - K), (0, Cp - Cout)))

    # --- kernel 1: tiled conv matmul + (sum, sumsq) per channel --------------
    kern1 = functools.partial(
        _conv_stats_kernel,
        collect_stats=bool(norm),
        act_mode=(act_mode if not norm else "none"),
        act_slope=act_slope)
    bytes1 = ((Mp * Kp + Kp * Cp) * jnp.dtype(compute_dtype).itemsize
              + Mp * Cp * 4 + 8 * Cp * 4)
    conv_out, stats = pl.pallas_call(
        kern1,
        out_shape=(
            jax.ShapeDtypeStruct((Mp, Cp), jnp.float32),
            jax.ShapeDtypeStruct((8, Cp), jnp.float32),
        ),
        grid=(num_m, num_k),
        in_specs=[
            pl.BlockSpec((tm, tk), lambda i, k: (i, k)),
            pl.BlockSpec((tk, Cp), lambda i, k: (k, 0)),
        ],
        out_specs=(
            pl.BlockSpec((tm, Cp), lambda i, k: (i, 0)),
            pl.BlockSpec((8, Cp), lambda i, k: (0, 0)),
        ),
        scratch_shapes=[pltpu.VMEM((tm, Cp), jnp.float32)],
        compiler_params=pltpu.CompilerParams(
            dimension_semantics=("arbitrary", "arbitrary"),
            vmem_limit_bytes=32 * 1024 * 1024),
        cost_estimate=pl.CostEstimate(
            flops=2 * Mp * Kp * Cp, transcendentals=0, bytes_accessed=bytes1),
    )(patches_p, w_p)

    if norm:
        # Fold BatchNorm (biased batch stats) into one per-channel scale/shift.
        mean = stats[0] / M
        var = jnp.maximum(stats[1] / M - mean * mean, 0.0)
        gamma_p = jnp.pad(gamma.astype(jnp.float32), (0, Cp - Cout))
        beta_p = jnp.pad(beta.astype(jnp.float32), (0, Cp - Cout))
        scale = gamma_p * lax.rsqrt(var + eps)
        shift = beta_p - mean * scale

        kern2 = functools.partial(_bn_act_kernel, act_mode=act_mode,
                                  act_slope=act_slope)
        out = pl.pallas_call(
            kern2,
            out_shape=jax.ShapeDtypeStruct((Mp, Cp), jnp.float32),
            grid=(num_m,),
            in_specs=[
                pl.BlockSpec((tm, Cp), lambda i: (i, 0)),
                pl.BlockSpec((1, Cp), lambda i: (0, 0)),
                pl.BlockSpec((1, Cp), lambda i: (0, 0)),
            ],
            out_specs=pl.BlockSpec((tm, Cp), lambda i: (i, 0)),
            input_output_aliases={0: 0},          # normalize in place
            compiler_params=pltpu.CompilerParams(
                dimension_semantics=("parallel",),
                vmem_limit_bytes=32 * 1024 * 1024),
            cost_estimate=pl.CostEstimate(
                flops=2 * Mp * Cp, transcendentals=0,
                bytes_accessed=2 * Mp * Cp * 4),
        )(conv_out, scale.reshape(1, Cp), shift.reshape(1, Cp))
    else:
        out = conv_out

    # Un-pad, (M, Cout) -> (N, OH, OW, Cout) -> NCHW (module output layout).
    out = out[:M, :Cout].reshape(N, OH, OW, Cout).transpose(0, 3, 1, 2)
    return out.astype(x.dtype)


def _reference(x, weight, gamma, beta, *, stride, padding, norm, relu, eps):
    y = lax.conv_general_dilated(
        x, weight, window_strides=(stride, stride),
        padding=[(padding, padding), (padding, padding)],
        dimension_numbers=("NCHW", "OIHW", "NCHW"))
    if norm:
        mean = y.mean(axis=(0, 2, 3), keepdims=True)
        var = ((y - mean) ** 2).mean(axis=(0, 2, 3), keepdims=True)
        y = (y - mean) / jnp.sqrt(var + eps)
        y = y * gamma.reshape(1, -1, 1, 1) + beta.reshape(1, -1, 1, 1)
    if relu != []:
        if relu > 0:
            y = jnp.where(y >= 0, y, y * relu)
        elif relu == 0:
            y = jnp.maximum(y, 0.0)
    return y


if __name__ == "__main__":
    # Module config: CBR2D(nch_in=4, nch_out=8) with defaults
    # kernel_size=4, stride=4, padding=1, norm=True, relu=[], bias=False.
    N, Cin, H, W = 2, 4, 16, 16
    Cout, KS, STRIDE, PAD = 8, 4, 4, 1

    key = jax.random.PRNGKey(0)
    kx, kw, kg, kb = jax.random.split(key, 4)
    x = jax.random.normal(kx, (N, Cin, H, W), dtype=jnp.float32)
    weight = 0.1 * jax.random.normal(kw, (Cout, Cin, KS, KS), dtype=jnp.float32)
    gamma = 1.0 + 0.1 * jax.random.normal(kg, (Cout,), dtype=jnp.float32)
    beta = 0.1 * jax.random.normal(kb, (Cout,), dtype=jnp.float32)

    fwd = jax.jit(functools.partial(cbr2d_forward, kernel_size=KS,
                                    stride=STRIDE, padding=PAD,
                                    norm=True, relu=[]))
    y = jax.block_until_ready(fwd(x, weight, gamma, beta))
    assert y.shape == (N, Cout, 4, 4), y.shape

    # Structural correctness check: same math on bf16-rounded operands (the
    # kernel feeds the MXU bf16 operands with f32 accumulation).
    xb = x.astype(jnp.bfloat16).astype(jnp.float32)
    wb = weight.astype(jnp.bfloat16).astype(jnp.float32)
    y_ref_bf16 = _reference(xb, wb, gamma, beta, stride=STRIDE, padding=PAD,
                            norm=True, relu=[], eps=1e-5)
    assert jnp.allclose(y, y_ref_bf16, atol=2e-3, rtol=2e-3), \
        float(jnp.max(jnp.abs(y - y_ref_bf16)))

    # Sanity bound vs the full-f32 reference (difference = bf16 operand
    # rounding only; BatchNorm keeps the output at unit scale).
    y_ref = _reference(x, weight, gamma, beta, stride=STRIDE, padding=PAD,
                       norm=True, relu=[], eps=1e-5)
    assert jnp.allclose(y, y_ref, atol=1e-1, rtol=1e-1), \
        float(jnp.max(jnp.abs(y - y_ref)))

    print("KERNEL_OK")
</pallas_src>

<mosaic_0001>
module attributes {stable_mosaic.version = 11 : i64} {
  func.func @_conv_stats_kernel(%arg0: i32, %arg1: i32, %arg2: memref<32x128xbf16, #tpu.memory_space<vmem>>, %arg3: memref<128x128xbf16, #tpu.memory_space<vmem>>, %arg4: memref<32x128xf32, #tpu.memory_space<vmem>>, %arg5: memref<8x128xf32, #tpu.memory_space<vmem>>, %arg6: memref<32x128xf32, #tpu.memory_space<vmem>>) attributes {dimension_semantics = [#tpu.dimension_semantics<arbitrary>, #tpu.dimension_semantics<arbitrary>], iteration_bounds = array<i64: 1, 1>, scalar_prefetch = 0 : i64, scratch_operands = 1 : i64, tpu.core_type = #tpu.core_type<tc>, window_params = [{transform_indices = @transform_0, window_bounds = array<i64: 32, 128>}, {transform_indices = @transform_1, window_bounds = array<i64: 128, 128>}, {transform_indices = @transform_2, window_bounds = array<i64: 32, 128>}, {pipeline_mode = #tpu.pipeline_mode<synchronous>, transform_indices = @transform_3, window_bounds = array<i64: 8, 128>}]} {
    %c0_i32 = arith.constant 0 : i32
    %0 = arith.cmpi eq, %arg0, %c0_i32 : i32
    %c0_i32_0 = arith.constant 0 : i32
    %1 = arith.cmpi eq, %arg1, %c0_i32_0 : i32
    %2 = arith.andi %0, %1 : i1
    %3 = arith.extui %2 : i1 to i32
    %c0_i32_1 = arith.constant 0 : i32
    %4 = arith.cmpi ne, %3, %c0_i32_1 : i32
    scf.if %4 {
      %cst_13 = arith.constant 0.000000e+00 : f32
      %17 = vector.broadcast %cst_13 : f32 to vector<8x128xf32>
      %c0_14 = arith.constant 0 : index
      %c0_15 = arith.constant 0 : index
      %18 = vector.load %arg5[%c0_14, %c0_15] : memref<8x128xf32, #tpu.memory_space<vmem>>, vector<8x128xf32>
      tpu.vector_store %arg5[%c0_14, %c0_15], %17 {strides = array<i32>} : memref<8x128xf32, #tpu.memory_space<vmem>>, vector<8x128xf32>,
    } else {
    }
    %c0_i32_2 = arith.constant 0 : i32
    %5 = arith.cmpi eq, %arg1, %c0_i32_2 : i32
    %6 = arith.extui %5 : i1 to i32
    %c0_i32_3 = arith.constant 0 : i32
    %7 = arith.cmpi ne, %6, %c0_i32_3 : i32
    scf.if %7 {
      %cst_13 = arith.constant 0.000000e+00 : f32
      %17 = vector.broadcast %cst_13 : f32 to vector<32x128xf32>
      %c0_14 = arith.constant 0 : index
      %c0_15 = arith.constant 0 : index
      %18 = vector.load %arg6[%c0_14, %c0_15] : memref<32x128xf32, #tpu.memory_space<vmem>>, vector<32x128xf32>
      tpu.vector_store %arg6[%c0_14, %c0_15], %17 {strides = array<i32>} : memref<32x128xf32, #tpu.memory_space<vmem>>, vector<32x128xf32>,
    } else {
    }
    %c0 = arith.constant 0 : index
    %c0_4 = arith.constant 0 : index
    %8 = vector.load %arg6[%c0, %c0_4] : memref<32x128xf32, #tpu.memory_space<vmem>>, vector<32x128xf32>
    %c0_5 = arith.constant 0 : index
    %c0_6 = arith.constant 0 : index
    %9 = vector.load %arg2[%c0_5, %c0_6] : memref<32x128xbf16, #tpu.memory_space<vmem>>, vector<32x128xbf16>
    %c0_7 = arith.constant 0 : index
    %c0_8 = arith.constant 0 : index
    %10 = vector.load %arg3[%c0_7, %c0_8] : memref<128x128xbf16, #tpu.memory_space<vmem>>, vector<128x128xbf16>
    %cst = arith.constant dense<0.000000e+00> : vector<32x128xf32>
    %11 = tpu.matmul %9, %10, %cst {dimension_numbers = #tpu.dot_dimension_numbers<[1], [0], [0], [1], [0, 0, 1, 1], [], []>} : vector<32x128xbf16>, vector<128x128xbf16>, vector<32x128xf32> -> vector<32x128xf32>
    %12 = arith.addf %8, %11 : vector<32x128xf32>
    %c0_9 = arith.constant 0 : index
    %c0_10 = arith.constant 0 : index
    %13 = vector.load %arg6[%c0_9, %c0_10] : memref<32x128xf32, #tpu.memory_space<vmem>>, vector<32x128xf32>
    tpu.vector_store %arg6[%c0_9, %c0_10], %12 {strides = array<i32>} : memref<32x128xf32, #tpu.memory_space<vmem>>, vector<32x128xf32>,
    %c0_i32_11 = arith.constant 0 : i32
    %14 = arith.cmpi eq, %arg1, %c0_i32_11 : i32
    %15 = arith.extui %14 : i1 to i32
    %c0_i32_12 = arith.constant 0 : i32
    %16 = arith.cmpi ne, %15, %c0_i32_12 : i32
    scf.if %16 {
      %c0_13 = arith.constant 0 : index
      %c0_14 = arith.constant 0 : index
      %17 = vector.load %arg6[%c0_13, %c0_14] : memref<32x128xf32, #tpu.memory_space<vmem>>, vector<32x128xf32>
      %c0_15 = arith.constant 0 : index
      %c0_16 = arith.constant 0 : index
      %18 = vector.load %arg5[%c0_15, %c0_16] : memref<8x128xf32, #tpu.memory_space<vmem>>, vector<1x128xf32>
      %cst_17 = arith.constant dense<0.000000e+00> : vector<128xf32>
      %19 = vector.multi_reduction <add>, %17, %cst_17 [0] : vector<32x128xf32> to vector<128xf32>
      %20 = vector.shape_cast %19 : vector<128xf32> to vector<1x128xf32>
      %21 = arith.addf %18, %20 : vector<1x128xf32>
      %c0_18 = arith.constant 0 : index
      %c0_19 = arith.constant 0 : index
      %22 = vector.load %arg5[%c0_18, %c0_19] : memref<8x128xf32, #tpu.memory_space<vmem>>, vector<1x128xf32>
      tpu.vector_store %arg5[%c0_18, %c0_19], %21 {strides = array<i32>} : memref<8x128xf32, #tpu.memory_space<vmem>>, vector<1x128xf32>,
      %c1 = arith.constant 1 : index
      %c0_20 = arith.constant 0 : index
      %23 = vector.load %arg5[%c1, %c0_20] : memref<8x128xf32, #tpu.memory_space<vmem>>, vector<1x128xf32>
      %24 = arith.mulf %17, %17 : vector<32x128xf32>
      %cst_21 = arith.constant dense<0.000000e+00> : vector<128xf32>
      %25 = vector.multi_reduction <add>, %24, %cst_21 [0] : vector<32x128xf32> to vector<128xf32>
      %26 = vector.shape_cast %25 : vector<128xf32> to vector<1x128xf32>
      %27 = arith.addf %23, %26 : vector<1x128xf32>
      %c1_22 = arith.constant 1 : index
      %c0_23 = arith.constant 0 : index
      %28 = vector.load %arg5[%c1_22, %c0_23] : memref<8x128xf32, #tpu.memory_space<vmem>>, vector<1x128xf32>
      tpu.vector_store %arg5[%c1_22, %c0_23], %27 {strides = array<i32>} : memref<8x128xf32, #tpu.memory_space<vmem>>, vector<1x128xf32>,
      %c0_24 = arith.constant 0 : index
      %c0_25 = arith.constant 0 : index
      %29 = vector.load %arg4[%c0_24, %c0_25] : memref<32x128xf32, #tpu.memory_space<vmem>>, vector<32x128xf32>
      tpu.vector_store %arg4[%c0_24, %c0_25], %17 {strides = array<i32>} : memref<32x128xf32, #tpu.memory_space<vmem>>, vector<32x128xf32>,
    } else {
    }
    return
  }
  func.func @transform_0(%arg0: i32, %arg1: i32) -> (i32, i32) {
    %c0_i32 = arith.constant 0 : i32
    return %arg0, %arg1 : i32, i32
  }
  func.func @transform_1(%arg0: i32, %arg1: i32) -> (i32, i32) {
    %c0_i32 = arith.constant 0 : i32
    %c0_i32_0 = arith.constant 0 : i32
    return %arg1, %c0_i32 : i32, i32
  }
  func.func @transform_2(%arg0: i32, %arg1: i32) -> (i32, i32) {
    %c0_i32 = arith.constant 0 : i32
    %c0_i32_0 = arith.constant 0 : i32
    return %arg0, %c0_i32 : i32, i32
  }
  func.func @transform_3(%arg0: i32, %arg1: i32) -> (i32, i32) {
    %c0_i32 = arith.constant 0 : i32
    %c0_i32_0 = arith.constant 0 : i32
    %c0_i32_1 = arith.constant 0 : i32
    return %c0_i32, %c0_i32_0 : i32, i32
  }
}

module attributes {stable_mosaic.version = 11 : i64} {
  func.func @_bn_act_kernel(%arg0: i32, %arg1: memref<32x128xf32, #tpu.memory_space<vmem>>, %arg2: memref<1x128xf32, #tpu.memory_space<vmem>>, %arg3: memref<1x128xf32, #tpu.memory_space<vmem>>, %arg4: memref<32x128xf32, #tpu.memory_space<vmem>>) attributes {dimension_semantics = [#tpu.dimension_semantics<parallel>], iteration_bounds = array<i64: 1>, scalar_prefetch = 0 : i64, scratch_operands = 0 : i64, tpu.core_type = #tpu.core_type<tc>, window_params = [{transform_indices = @transform_0, window_bounds = array<i64: 32, 128>}, {pipeline_mode = #tpu.pipeline_mode<synchronous>, transform_indices = @transform_1, window_bounds = array<i64: 1, 128>}, {pipeline_mode = #tpu.pipeline_mode<synchronous>, transform_indices = @transform_2, window_bounds = array<i64: 1, 128>}, {transform_indices = @transform_3, window_bounds = array<i64: 32, 128>}]} {
    %c0 = arith.constant 0 : index
    %c0_0 = arith.constant 0 : index
    %0 = vector.load %arg1[%c0, %c0_0] : memref<32x128xf32, #tpu.memory_space<vmem>>, vector<32x128xf32>
    %c0_1 = arith.constant 0 : index
    %c0_2 = arith.constant 0 : index
    %1 = vector.load %arg2[%c0_1, %c0_2] : memref<1x128xf32, #tpu.memory_space<vmem>>, vector<1x128xf32>
    %2 = vector.broadcast %1 : vector<1x128xf32> to vector<32x128xf32>
    %3 = arith.mulf %0, %2 : vector<32x128xf32>
    %c0_3 = arith.constant 0 : index
    %c0_4 = arith.constant 0 : index
    %4 = vector.load %arg3[%c0_3, %c0_4] : memref<1x128xf32, #tpu.memory_space<vmem>>, vector<1x128xf32>
    %5 = vector.broadcast %4 : vector<1x128xf32> to vector<32x128xf32>
    %6 = arith.addf %3, %5 : vector<32x128xf32>
    %c0_5 = arith.constant 0 : index
    %c0_6 = arith.constant 0 : index
    %7 = vector.load %arg4[%c0_5, %c0_6] : memref<32x128xf32, #tpu.memory_space<vmem>>, vector<32x128xf32>
    tpu.vector_store %arg4[%c0_5, %c0_6], %6 {strides = array<i32>} : memref<32x128xf32, #tpu.memory_space<vmem>>, vector<32x128xf32>,
    return
  }
  func.func @transform_0(%arg0: i32) -> (i32, i32) {
    %c0_i32 = arith.constant 0 : i32
    %c0_i32_0 = arith.constant 0 : i32
    return %arg0, %c0_i32 : i32, i32
  }
  func.func @transform_1(%arg0: i32) -> (i32, i32) {
    %c0_i32 = arith.constant 0 : i32
    %c0_i32_0 = arith.constant 0 : i32
    %c0_i32_1 = arith.constant 0 : i32
    return %c0_i32, %c0_i32_0 : i32, i32
  }
  func.func @transform_2(%arg0: i32) -> (i32, i32) {
    %c0_i32 = arith.constant 0 : i32
    %c0_i32_0 = arith.constant 0 : i32
    %c0_i32_1 = arith.constant 0 : i32
    return %c0_i32, %c0_i32_0 : i32, i32
  }
  func.func @transform_3(%arg0: i32) -> (i32, i32) {
    %c0_i32 = arith.constant 0 : i32
    %c0_i32_0 = arith.constant 0 : i32
    return %arg0, %c0_i32 : i32, i32
  }
}

</mosaic_0001>

<llo_original>
// kernel: cbr2d_forward.3
$region0: #{cbr2d_forward.3}
  #allocation0 [shape = 'u32[]', space=smem, size = 0x4, offset = 0x4, fixed_abs, tag = 'smem constant byte address 0x4 - core index']
  #allocation1 [shape = 'u32[72,128]{1,0:T(1,128)}', space=vmem, size = 0x9000, scoped, tag = 'internal scratch']
  %s0 = inlined_call_operand.vmem [shape: f32[32,128], index: 0, kind: input, shape index: {}, may-alias: {0,3}]
  %s1 = inlined_call_operand.vmem [shape: f32[1,128], index: 1, kind: input, shape index: {}]
  %s2 = inlined_call_operand.vmem [shape: f32[1,128], index: 2, kind: input, shape index: {}]
  %s3 = inlined_call_operand.vmem [shape: f32[32,128], index: 3, kind: output, shape index: {}, may-alias: {0,3}]
  %s4 = sld [smem:[#allocation0]]
  $region22: #{cbr2d_forward.3} parent=0
    _
  %s6 = ssub.s32 1, %s4
  %s7 = scalar_select 0, %s6, %s4
  // Predicated region
  $region2: #{cbr2d_forward.3} parent=0 // pred_check
    _
  $region3: #{cbr2d_forward.3} parent=0 // pred_check_branch
    %9 = sbr.rel (0) target = $region5
  $region4: #{cbr2d_forward.3} parent=0 // pred_region
    _
  $region5: #{cbr2d_forward.3} parent=0 // pred_fallthru
    _
  // Predicated region
  $region6: #{cbr2d_forward.3} parent=0 // pred_check
    _
  $region7: #{cbr2d_forward.3} parent=0 // pred_check_branch
    %11 = sbr.rel (0) target = $region9
  $region8: #{cbr2d_forward.3} parent=0 // pred_region
    _
  $region9: #{cbr2d_forward.3} parent=0 // pred_fallthru
    _
  // Predicated region
  $region10: #{cbr2d_forward.3} parent=0 // pred_check
    _
  $region11: #{cbr2d_forward.3} parent=0 // pred_check_branch
    %13 = sbr.rel (0) target = $region13
  $region12: #{cbr2d_forward.3} parent=0 // pred_region
    _
  $region13: #{cbr2d_forward.3} parent=0 // pred_fallthru
    _
  %v14 = vld [vmem:[%s0] sm:$0xff]
  %v15 = vld [vmem:[%s0 + $0x8] sm:$0xff]
  %v16 = vld [vmem:[%s0 + $0x10] sm:$0xff]
  %v17 = vld [vmem:[%s0 + $0x18] sm:$0xff]
  %v18 = vld [vmem:[%s1] sm:$0x1]
  %v20 = vperm.slane %v18, 0
  %v22 = vmul.f32 %v14, %v20
  %v23 = vmul.f32 %v15, %v20
  %v24 = vmul.f32 %v16, %v20
  %v25 = vmul.f32 %v17, %v20
  %v26 = vld [vmem:[%s2] sm:$0x1]
  %v28 = vperm.slane %v26, 0
  %v30 = vadd.f32 %v22, %v28
  %v31 = vadd.f32 %v23, %v28
  %v32 = vadd.f32 %v24, %v28
  %v33 = vadd.f32 %v25, %v28
  %34 = vst [vmem:[%s3] sm:$0xff] %v30
  %35 = vst [vmem:[%s3 + $0x8] sm:$0xff] %v31
  %36 = vst [vmem:[%s3 + $0x10] sm:$0xff] %v32
  %37 = vst [vmem:[%s3 + $0x18] sm:$0xff] %v33
  // Predicated region
  $region14: #{cbr2d_forward.3} parent=0 // pred_check
    _
  $region15: #{cbr2d_forward.3} parent=0 // pred_check_branch
    %39 = sbr.rel (0) target = $region17
  $region16: #{cbr2d_forward.3} parent=0 // pred_region
    _
  $region17: #{cbr2d_forward.3} parent=0 // pred_fallthru
    _
  // Predicated region
  $region18: #{cbr2d_forward.3} parent=0 // pred_check
    _
  $region19: #{cbr2d_forward.3} parent=0 // pred_check_branch
    %41 = sbr.rel (0) target = $region21
  $region20: #{cbr2d_forward.3} parent=0 // pred_region
    _
  $region21: #{cbr2d_forward.3} parent=0 // pred_fallthru
    _

// kernel: cbr2d_forward.2
$region0: #{cbr2d_forward.2}
  #allocation0 [shape = 'u32[]', space=smem, size = 0x4, offset = 0x4, fixed_abs, tag = 'smem constant byte address 0x4 - core index']
  #allocation1 [shape = 'u32[72,128]{1,0:T(1,128)}', space=vmem, size = 0x9000, scoped, tag = 'internal scratch']
  #allocation2 [shape = 'f32[32,128]{1,0:T(8,128)}', space=vmem, size = 0x4000, scoped, tag = 'scratch operand']
  %s0 = inlined_call_operand.vmem [shape: bf16[32,128], index: 0, kind: input, shape index: {}]
  %s1 = inlined_call_operand.vmem [shape: bf16[128,128], index: 1, kind: input, shape index: {}]
  %s2 = inlined_call_operand.vmem [shape: f32[32,128], index: 2, kind: output, shape index: {0}]
  %s3 = inlined_call_operand.vmem [shape: f32[8,128], index: 3, kind: output, shape index: {1}]
  %4 = xla_tuple %s2, %s3
  %s5 = sld [smem:[#allocation0]]
  $region38: #{cbr2d_forward.2} parent=0
    _
  %s7 = ssub.s32 1, %s5
  %s8 = scalar_select 0, %s7, %s5
  // Predicated region
  $region2: #{cbr2d_forward.2} parent=0 // pred_check
    _
  $region3: #{cbr2d_forward.2} parent=0 // pred_check_branch
    %10 = sbr.rel (0) target = $region5
  $region4: #{cbr2d_forward.2} parent=0 // pred_region
    _
  $region5: #{cbr2d_forward.2} parent=0 // pred_fallthru
    _
  // Predicated region
  $region6: #{cbr2d_forward.2} parent=0 // pred_check
    _
  $region7: #{cbr2d_forward.2} parent=0 // pred_check_branch
    %12 = sbr.rel (0) target = $region9
  $region8: #{cbr2d_forward.2} parent=0 // pred_region
    _
  $region9: #{cbr2d_forward.2} parent=0 // pred_fallthru
    _
  %p13 = scmp.eq.s32.totalorder 0, 0
  %p14 = scmp.eq.s32.totalorder 0, 0
  %p15 = pnand %p13, %p14
  %p16 = pneg %p15
  // Predicated region
  $region10: #{cbr2d_forward.2} parent=0 // pred_check
    _
  $region11: #{cbr2d_forward.2} parent=0 // pred_check_branch
    %18 = sbr.rel (%p15) target = $region13
  $region12: #{cbr2d_forward.2} parent=0 // pred_region
    %19 = vst [vmem:[%s3] sm:$0xff] 0.0
  $region13: #{cbr2d_forward.2} parent=0 // pred_fallthru
    _
  // Predicated region
  $region14: #{cbr2d_forward.2} parent=0 // pred_check
    %p20 = pneg %p14
  $region15: #{cbr2d_forward.2} parent=0 // pred_check_branch
    %22 = sbr.rel (%p20) target = $region17
  $region16: #{cbr2d_forward.2} parent=0 // pred_region
    %23 = vst [vmem:[#allocation2] sm:$0xff] 0.0
    %24 = vst [vmem:[#allocation2 + $0x8] sm:$0xff] 0.0
    %25 = vst [vmem:[#allocation2 + $0x10] sm:$0xff] 0.0
    %26 = vst [vmem:[#allocation2 + $0x18] sm:$0xff] 0.0
  $region17: #{cbr2d_forward.2} parent=0 // pred_fallthru
    _
  %v27 = vld [vmem:[#allocation2] sm:$0xff]
  %v28 = vld [vmem:[#allocation2 + $0x8] sm:$0xff]
  %v29 = vld [vmem:[#allocation2 + $0x10] sm:$0xff]
  %v30 = vld [vmem:[#allocation2 + $0x18] sm:$0xff]
  %v31 = vld [vmem:[%s0] sm:$0xf]
  %v32 = vld [vmem:[%s0 + $0x4] sm:$0xf]
  %v33 = vld [vmem:[%s0 + $0x8] sm:$0xf]
  %v34 = vld [vmem:[%s0 + $0xc] sm:$0xf]
  %v35 = vld [vmem:[%s1] sm:$0xf]
  %v36 = vld [vmem:[%s1 + $0x4] sm:$0xf]
  %v37 = vld [vmem:[%s1 + $0x8] sm:$0xf]
  %v38 = vld [vmem:[%s1 + $0xc] sm:$0xf]
  %v39 = vld [vmem:[%s1 + $0x10] sm:$0xf]
  %v40 = vld [vmem:[%s1 + $0x14] sm:$0xf]
  %v41 = vld [vmem:[%s1 + $0x18] sm:$0xf]
  %v42 = vld [vmem:[%s1 + $0x1c] sm:$0xf]
  %v43 = vld [vmem:[%s1 + $0x20] sm:$0xf]
  %v44 = vld [vmem:[%s1 + $0x24] sm:$0xf]
  %v45 = vld [vmem:[%s1 + $0x28] sm:$0xf]
  %v46 = vld [vmem:[%s1 + $0x2c] sm:$0xf]
  %v47 = vld [vmem:[%s1 + $0x30] sm:$0xf]
  %v48 = vld [vmem:[%s1 + $0x34] sm:$0xf]
  %v49 = vld [vmem:[%s1 + $0x38] sm:$0xf]
  %v50 = vld [vmem:[%s1 + $0x3c] sm:$0xf]
  %v55 = vunpack.c.l.b16 %v31
  %v56 = vunpack.c.l.b16 %v32
  %v57 = vunpack.c.l.b16 %v33
  %v58 = vunpack.c.l.b16 %v34
  %v59 = vpack.c.b16 %v56, %v55
  %v60 = vpack.c.b16 %v58, %v57
  %v79 = vunpack.c.l.b16 %v35
  %v80 = vunpack.c.l.b16 %v36
  %v81 = vunpack.c.l.b16 %v37
  %v82 = vunpack.c.l.b16 %v38
  %v83 = vunpack.c.l.b16 %v39
  %v84 = vunpack.c.l.b16 %v40
  %v85 = vunpack.c.l.b16 %v41
  %v86 = vunpack.c.l.b16 %v42
  %v87 = vunpack.c.l.b16 %v43
  %v88 = vunpack.c.l.b16 %v44
  %v89 = vunpack.c.l.b16 %v45
  %v90 = vunpack.c.l.b16 %v46
  %v91 = vunpack.c.l.b16 %v47
  %v92 = vunpack.c.l.b16 %v48
  %v93 = vunpack.c.l.b16 %v49
  %v94 = vunpack.c.l.b16 %v50
  %v95 = vpack.c.b16 %v80, %v79
  %v96 = vpack.c.b16 %v82, %v81
  %v97 = vpack.c.b16 %v84, %v83
  %v98 = vpack.c.b16 %v86, %v85
  %v99 = vpack.c.b16 %v88, %v87
  %v100 = vpack.c.b16 %v90, %v89
  %v101 = vpack.c.b16 %v92, %v91
  %v102 = vpack.c.b16 %v94, %v93
  %111 = vmatpush.bf16.msra.mxu0 %v102
  %112 = vmatpush.bf16.msra.mxu0 %v101
  %113 = vmatpush.bf16.msra.mxu0 %v100
  %114 = vmatpush.bf16.msra.mxu0 %v99
  %115 = vmatpush.bf16.msra.mxu0 %v98
  %116 = vmatpush.bf16.msra.mxu0 %v97
  %117 = vmatpush.bf16.msra.mxu0 %v96
  %118 = vmatpush.bf16.msra.mxu0 %v95
  %119 = vmatmul.bf16.gmra.mxu0 %v59
  %v120 = vpop.f32.mrf.mxu0
  %v121 = vadd.f32 0.0, %v120
  %v122 = vpop.f32.mrf.mxu0
  %v123 = vadd.f32 0.0, %v122
  %124 = vmatmul.bf16.gmra.mxu0 %v60
  %v125 = vpop.f32.mrf.mxu0
  %v126 = vadd.f32 0.0, %v125
  %v127 = vpop.f32.mrf.mxu0
  %v128 = vadd.f32 0.0, %v127
  %129 = vdwg.mxu0
  %v130 = vadd.f32 %v27, %v121
  %v131 = vadd.f32 %v28, %v123
  %v132 = vadd.f32 %v29, %v126
  %v133 = vadd.f32 %v30, %v128
  %134 = vst [vmem:[#allocation2] sm:$0xff] %v130
  %135 = vst [vmem:[#allocation2 + $0x8] sm:$0xff] %v131
  %136 = vst [vmem:[#allocation2 + $0x10] sm:$0xff] %v132
  %137 = vst [vmem:[#allocation2 + $0x18] sm:$0xff] %v133
  // Predicated region
  $region18: #{cbr2d_forward.2} parent=0 // pred_check
    %p138 = pneg %p14
  $region19: #{cbr2d_forward.2} parent=0 // pred_check_branch
    %140 = sbr.rel (%p138) target = $region21
  $region20: #{cbr2d_forward.2} parent=0 // pred_region
    %v141 = vld [vmem:[#allocation2] sm:$0xff]
    %v142 = vld [vmem:[#allocation2 + $0x8] sm:$0xff]
    %v143 = vld [vmem:[#allocation2 + $0x10] sm:$0xff]
    %v144 = vld [vmem:[#allocation2 + $0x18] sm:$0xff]
    %v145 = vld [vmem:[%s3] sm:$0x1]
    %v146 = vadd.f32 %v141, %v142
    %v147 = vadd.f32 %v146, %v143
    %v148 = vadd.f32 %v147, %v144
    %v149 = vrot.slane %v148, 4
    %v150 = vadd.f32 %v148, %v149
    %v151 = vrot.slane %v150, 2
    %v152 = vadd.f32 %v150, %v151
    %v153 = vrot.slane %v152, 1
    %v154 = vadd.f32 %v152, %v153
    %v155 = vadd.f32 %v145, %v154
    %156 = vst [vmem:[%s3] sm:$0x1] %v155
    %v157 = vld [vmem:[%s3 + $0x1] sm:$0x1]
    %v158 = vmul.f32 %v141, %v141
    %v159 = vmul.f32 %v142, %v142
    %v160 = vmul.f32 %v143, %v143
    %v161 = vmul.f32 %v144, %v144
    %v162 = vadd.f32 %v158, %v159
    %v163 = vadd.f32 %v162, %v160
    %v164 = vadd.f32 %v163, %v161
    %v165 = vrot.slane %v164, 4
    %v166 = vadd.f32 %v164, %v165
    %v167 = vrot.slane %v166, 2
    %v168 = vadd.f32 %v166, %v167
    %v169 = vrot.slane %v168, 1
    %v170 = vadd.f32 %v168, %v169
    %v171 = vadd.f32 %v157, %v170
    %172 = vst [vmem:[%s3 + $0x1] sm:$0x1] %v171
    %173 = vst [vmem:[%s2] sm:$0xff] %v141
    %174 = vst [vmem:[%s2 + $0x8] sm:$0xff] %v142
    %175 = vst [vmem:[%s2 + $0x10] sm:$0xff] %v143
    %176 = vst [vmem:[%s2 + $0x18] sm:$0xff] %v144
  $region21: #{cbr2d_forward.2} parent=0 // pred_fallthru
    _
  // Predicated region
  $region22: #{cbr2d_forward.2} parent=0 // pred_check
    _
  $region23: #{cbr2d_forward.2} parent=0 // pred_check_branch
    %178 = sbr.rel (0) target = $region25
  $region24: #{cbr2d_forward.2} parent=0 // pred_region
    _
  $region25: #{cbr2d_forward.2} parent=0 // pred_fallthru
    _
  // Predicated region
  $region26: #{cbr2d_forward.2} parent=0 // pred_check
    _
  $region27: #{cbr2d_forward.2} parent=0 // pred_check_branch
    %180 = sbr.rel (0) target = $region29
  $region28: #{cbr2d_forward.2} parent=0 // pred_region
    _
  $region29: #{cbr2d_forward.2} parent=0 // pred_fallthru
    _
  // Predicated region
  $region30: #{cbr2d_forward.2} parent=0 // pred_check
    _
  $region31: #{cbr2d_forward.2} parent=0 // pred_check_branch
    %182 = sbr.rel (0) target = $region33
  $region32: #{cbr2d_forward.2} parent=0 // pred_region
    _
  $region33: #{cbr2d_forward.2} parent=0 // pred_fallthru
    _
  // Predicated region
  $region34: #{cbr2d_forward.2} parent=0 // pred_check
    _
  $region35: #{cbr2d_forward.2} parent=0 // pred_check_branch
    %184 = sbr.rel (0) target = $region37
  $region36: #{cbr2d_forward.2} parent=0 // pred_region
    _
  $region37: #{cbr2d_forward.2} parent=0 // pred_fallthru
    _

</llo_original>
